<compile_context>
chip_gen: v7x
topology: tpu7x:2x2x1
jax: 0.10.0
libtpu: 0.0.40
codegen_flags: <defaults>
</compile_context>

<pallas_src>
import functools

import jax
import jax.numpy as jnp
from jax import lax
from jax.experimental import pallas as pl
from jax.experimental.pallas import tpu as pltpu


def _round_up(x, m):
    return (x + m - 1) // m * m


def _make_kernel(S, E, HC, B_blk, fold_taps):
    Lmax = S + 1                  # conv1/conv3 output length; conv2 has length S
    M = Lmax * B_blk              # M-dimension of the fused conv matmul

    def kernel(x_ref, w_ref, b_ref, mask_ref, wfc_ref, bfc_ref, out_ref):
        # x_ref block: (S_pad, B_blk, E), sequence-major; tap j = rows [j, j+Lmax).
        x = x_ref[...]

        if fold_taps:
            # Fold the 4 taps into the contraction dim: one (M, 4E) @ (4E, HC) dot.
            x4 = jnp.concatenate([x[j:j + Lmax] for j in range(4)], axis=-1)
            acc = jnp.dot(x4.reshape(M, 4 * E), w_ref[...],
                          preferred_element_type=jnp.float32)
        else:
            # Consecutive accumulating dots (in-place MRB accumulation on v7x).
            acc = jnp.dot(x[0:Lmax].reshape(M, E), w_ref[0],
                          preferred_element_type=jnp.float32)
            for j in range(1, 4):
                acc = acc + jnp.dot(x[j:j + Lmax].reshape(M, E), w_ref[j],
                                    preferred_element_type=jnp.float32)

        acc = jnp.maximum(acc + b_ref[...], 0.0)         # bias + ReLU, (M, HC) f32

        # AdaptiveMaxPool1d(1): balanced pairwise max tree over output positions.
        # Position S exists for conv1/conv3 (length S+1) but not for conv2
        # (length S): its columns are zeroed via the precomputed mask — ReLU
        # output >= 0, so 0 never wins the max.
        slices = [acc[l * B_blk:(l + 1) * B_blk, :] for l in range(S)]
        slices.append(acc[S * B_blk:(S + 1) * B_blk, :] * mask_ref[...])
        while len(slices) > 1:
            nxt = [jnp.maximum(slices[i], slices[i + 1])
                   for i in range(0, len(slices) - 1, 2)]
            if len(slices) % 2:
                nxt.append(slices[-1])
            slices = nxt
        pooled = slices[0]                               # (B_blk, HC)

        # TODO(synk): nn.Dropout is identity in eval mode; stochastic train-mode
        # dropout is not implemented.
        out = jnp.dot(pooled.astype(wfc_ref.dtype), wfc_ref[...],
                      preferred_element_type=jnp.float32)
        out_ref[...] = out + bfc_ref[...]                # (B_blk, O_pad), lane-dense

    return kernel


@functools.partial(jax.jit, static_argnames=("compute_dtype",))
def _forward(text, params, *, compute_dtype):
    emb_table, w1, b1, w2, b2, w3, b3, wfc, bfc = params
    B, S = text.shape
    V, E = emb_table.shape
    H = b1.shape[0]
    O = bfc.shape[0]
    S_pad = S + 4                         # 2 zeros each side covers all three convs
    Lmax = S + 1
    cdt = jnp.dtype(compute_dtype)
    sub = 16 if cdt.itemsize == 2 else 8  # sublane tile (bf16 packs row pairs)

    HC = _round_up(3 * H, 128)            # lane-dense conv/pool width
    O_pad = _round_up(max(O, 128), 128)   # lane-dense FC output width
    fold_taps = (4 * E) <= 512            # fold taps into K while K stays MXU-sized

    # --- batch block size from a per-step VMEM budget (valid on v5e..v7x) ---
    per_row = (2 * S_pad * E * cdt.itemsize                       # 2x input block
               + Lmax * HC * 4                                    # f32 accumulator
               + (Lmax * 4 * E * cdt.itemsize if fold_taps
                  else Lmax * HC * 4)                             # x4 / partial sums
               + 2 * O_pad * 4)                                   # 2x output block
    budget = 24 * 1024 * 1024
    B_ceil = _round_up(B, sub)
    B_blk = max(sub, min((budget // per_row) // sub * sub, 1024, B_ceil))
    if B_ceil // B_blk < 2 and B_ceil >= 2 * sub:   # >=2 grid steps for v7x megacore
        B_blk = _round_up((B_ceil + 1) // 2, sub)
    nb = -(-B_ceil // B_blk)
    B_pad = nb * B_blk

    # --- embeddings: single padded gather straight into (S_pad, B_pad, E).
    #     Zero row appended to the table; pad positions index it, so no extra
    #     HBM pad/transpose pass over the dominant activation tensor. ---
    table = jnp.concatenate([emb_table.astype(cdt), jnp.zeros((1, E), cdt)], axis=0)
    idx = jnp.full((S_pad, B_pad), V, jnp.int32)
    idx = idx.at[2:2 + S, :B].set(text.T.astype(jnp.int32))
    x = table[idx]                                                 # (S_pad, B_pad, E)

    # --- combined conv weight: (4 taps, E, HC); zero-padded taps/columns let all
    #     three convs share one accumulation. Columns: [conv1 | conv2 | conv3 | 0].
    w_all = jnp.zeros((4, E, HC), jnp.float32)
    w_all = w_all.at[1, :, 0:H].set(w1[:, :, 0].T)                 # conv1 (K=2, pad=1)
    w_all = w_all.at[2, :, 0:H].set(w1[:, :, 1].T)
    for k in range(3):                                             # conv2 (K=3, pad=1)
        w_all = w_all.at[k + 1, :, H:2 * H].set(w2[:, :, k].T)
    for k in range(4):                                             # conv3 (K=4, pad=2)
        w_all = w_all.at[k, :, 2 * H:3 * H].set(w3[:, :, k].T)
    w_all = w_all.astype(cdt)
    if fold_taps:
        w_all = w_all.reshape(4 * E, HC)
    bias_all = jnp.zeros((1, HC), jnp.float32)
    bias_all = bias_all.at[0, :3 * H].set(jnp.concatenate([b1, b2, b3]))
    # conv2 has no output at position S: zero its columns at that last position.
    mask = jnp.ones((1, HC), jnp.float32)
    mask = mask.at[0, H:2 * H].set(0.0)
    mask = mask.at[0, 3 * H:].set(0.0)

    # --- FC weights padded to lane-dense shapes (zero rows/cols are inert) ---
    wfc_p = jnp.zeros((HC, O_pad), jnp.float32).at[:3 * H, :O].set(wfc.T).astype(cdt)
    bfc_p = jnp.zeros((1, O_pad), jnp.float32).at[0, :O].set(bfc)

    w_spec = (pl.BlockSpec((4 * E, HC), lambda i: (0, 0)) if fold_taps
              else pl.BlockSpec((4, E, HC), lambda i: (0, 0, 0)))

    out = pl.pallas_call(
        _make_kernel(S, E, HC, B_blk, fold_taps),
        out_shape=jax.ShapeDtypeStruct((B_pad, O_pad), jnp.float32),
        grid=(nb,),
        in_specs=[
            pl.BlockSpec((S_pad, B_blk, E), lambda i: (0, i, 0)),  # activations
            w_spec,                                                # resident conv weights
            pl.BlockSpec((1, HC), lambda i: (0, 0)),               # conv bias
            pl.BlockSpec((1, HC), lambda i: (0, 0)),               # conv2 last-pos mask
            pl.BlockSpec((HC, O_pad), lambda i: (0, 0)),           # FC weight
            pl.BlockSpec((1, O_pad), lambda i: (0, 0)),            # FC bias
        ],
        out_specs=pl.BlockSpec((B_blk, O_pad), lambda i: (i, 0)),
        compiler_params=pltpu.CompilerParams(
            dimension_semantics=("parallel",),
            vmem_limit_bytes=48 * 1024 * 1024),
    )(x, w_all, bias_all, mask, wfc_p, bfc_p)

    return out[:B, :O]


def sentence_classifier_forward(text, text_lengths, params, *,
                                compute_dtype=jnp.bfloat16, validate=False):
    if validate:
        # Optional host-synchronizing checks mirroring the PyTorch ValueErrors.
        # Off by default: they block async dispatch and dominate latency for a
        # microsecond-scale kernel.
        vocab_size = params[0].shape[0]
        if int(jnp.max(text)) >= vocab_size:
            raise ValueError("Text contains indices out of vocab range")
        if bool(jnp.any(text_lengths <= 0)):
            raise ValueError("text_lengths contains non-positive values")
        if bool(jnp.any(text_lengths > text.shape[1])):
            raise ValueError("text_lengths contains values larger than sequence length")
    # text_lengths is otherwise unused by the computation, matching the reference.
    return _forward(text, tuple(params), compute_dtype=compute_dtype)


def ref_forward(text, params):
    """Pure-JAX reference matching the PyTorch module (eval mode, f32)."""
    emb_table, w1, b1, w2, b2, w3, b3, wfc, bfc = params
    emb = emb_table[text].astype(jnp.float32)               # (B, S, E)
    x = jnp.transpose(emb, (0, 2, 1))                       # (B, E, S)  NCW

    def conv1d(x, w, b, pad):
        out = lax.conv_general_dilated(
            x, w, window_strides=(1,), padding=[(pad, pad)],
            dimension_numbers=("NCH", "OIH", "NCH"))
        return out + b[None, :, None]

    c1 = jax.nn.relu(conv1d(x, w1, b1, 1))
    c2 = jax.nn.relu(conv1d(x, w2, b2, 1))
    c3 = jax.nn.relu(conv1d(x, w3, b3, 2))
    p1 = jnp.max(c1, axis=-1)
    p2 = jnp.max(c2, axis=-1)
    p3 = jnp.max(c3, axis=-1)
    sent = jnp.concatenate([p1, p2, p3], axis=1)
    return sent @ wfc.T + bfc


if __name__ == "__main__":
    # Small, deterministic shapes consistent with the module.
    VOCAB, E, H, O = 50, 32, 32, 4
    B, S = 2, 8

    key = jax.random.PRNGKey(0)
    keys = jax.random.split(key, 12)

    emb_table = jax.random.normal(keys[0], (VOCAB, E), jnp.float32) * 0.1
    w1 = jax.random.normal(keys[1], (H, E, 2), jnp.float32) * 0.1   # Conv1d(E,H,K=2,p=1)
    b1 = jax.random.normal(keys[2], (H,), jnp.float32) * 0.1
    w2 = jax.random.normal(keys[3], (H, E, 3), jnp.float32) * 0.1   # Conv1d(E,H,K=3,p=1)
    b2 = jax.random.normal(keys[4], (H,), jnp.float32) * 0.1
    w3 = jax.random.normal(keys[5], (H, E, 4), jnp.float32) * 0.1   # Conv1d(E,H,K=4,p=2)
    b3 = jax.random.normal(keys[6], (H,), jnp.float32) * 0.1
    wfc = jax.random.normal(keys[7], (O, 3 * H), jnp.float32) * 0.1  # Linear(3H, O)
    bfc = jax.random.normal(keys[8], (O,), jnp.float32) * 0.1
    params = (emb_table, w1, b1, w2, b2, w3, b3, wfc, bfc)

    text = jax.random.randint(keys[9], (B, S), 0, VOCAB, jnp.int32)
    text_lengths = jax.random.randint(keys[10], (B,), 1, S + 1, jnp.int32)

    ref = ref_forward(text, params)

    # f32 compute mode: tight check of the algorithm against the pure-JAX reference.
    out_f32 = jax.block_until_ready(
        sentence_classifier_forward(text, text_lengths, params,
                                    compute_dtype=jnp.float32, validate=True))
    assert out_f32.shape == (B, O)
    assert jnp.allclose(out_f32, ref, atol=1e-4, rtol=1e-4), (out_f32, ref)

    # Default bf16 MXU inputs with f32 accumulation: looser tolerance vs the f32 ref.
    out_bf16 = jax.block_until_ready(
        sentence_classifier_forward(text, text_lengths, params))
    assert out_bf16.shape == (B, O)
    assert jnp.allclose(out_bf16, ref, atol=2e-2, rtol=2e-2), (out_bf16, ref)

    print("KERNEL_OK")
</pallas_src>

<mosaic_0001>
module attributes {stable_mosaic.version = 11 : i64} {
  func.func @kernel(%arg0: i32, %arg1: memref<12x8x32xf32, #tpu.memory_space<vmem>>, %arg2: memref<128x128xf32, #tpu.memory_space<vmem>>, %arg3: memref<1x128xf32, #tpu.memory_space<vmem>>, %arg4: memref<1x128xf32, #tpu.memory_space<vmem>>, %arg5: memref<128x128xf32, #tpu.memory_space<vmem>>, %arg6: memref<1x128xf32, #tpu.memory_space<vmem>>, %arg7: memref<8x128xf32, #tpu.memory_space<vmem>>) attributes {dimension_semantics = [#tpu.dimension_semantics<parallel>], iteration_bounds = array<i64: 1>, scalar_prefetch = 0 : i64, scratch_operands = 0 : i64, tpu.core_type = #tpu.core_type<tc>, window_params = [{transform_indices = @transform_0, window_bounds = array<i64: 12, 8, 32>}, {pipeline_mode = #tpu.pipeline_mode<synchronous>, transform_indices = @transform_1, window_bounds = array<i64: 128, 128>}, {pipeline_mode = #tpu.pipeline_mode<synchronous>, transform_indices = @transform_2, window_bounds = array<i64: 1, 128>}, {pipeline_mode = #tpu.pipeline_mode<synchronous>, transform_indices = @transform_3, window_bounds = array<i64: 1, 128>}, {pipeline_mode = #tpu.pipeline_mode<synchronous>, transform_indices = @transform_4, window_bounds = array<i64: 128, 128>}, {pipeline_mode = #tpu.pipeline_mode<synchronous>, transform_indices = @transform_5, window_bounds = array<i64: 1, 128>}, {transform_indices = @transform_6, window_bounds = array<i64: 8, 128>}]} {
    %c0 = arith.constant 0 : index
    %c0_0 = arith.constant 0 : index
    %c0_1 = arith.constant 0 : index
    %0 = vector.load %arg1[%c0, %c0_0, %c0_1] : memref<12x8x32xf32, #tpu.memory_space<vmem>>, vector<12x8x32xf32>
    %1 = vector.extract_strided_slice %0 {offsets = [0, 0, 0], sizes = [9, 8, 32], strides = [1, 1, 1]} : vector<12x8x32xf32> to vector<9x8x32xf32>
    %2 = vector.extract_strided_slice %0 {offsets = [1, 0, 0], sizes = [9, 8, 32], strides = [1, 1, 1]} : vector<12x8x32xf32> to vector<9x8x32xf32>
    %3 = vector.extract_strided_slice %0 {offsets = [2, 0, 0], sizes = [9, 8, 32], strides = [1, 1, 1]} : vector<12x8x32xf32> to vector<9x8x32xf32>
    %4 = vector.extract_strided_slice %0 {offsets = [3, 0, 0], sizes = [9, 8, 32], strides = [1, 1, 1]} : vector<12x8x32xf32> to vector<9x8x32xf32>
    %5 = tpu.concatenate %1, %2, %3, %4 in 2 : vector<9x8x32xf32>, vector<9x8x32xf32>, vector<9x8x32xf32>, vector<9x8x32xf32> -> vector<9x8x128xf32>
    %6 = vector.shape_cast %5 : vector<9x8x128xf32> to vector<72x128xf32>
    %c0_2 = arith.constant 0 : index
    %c0_3 = arith.constant 0 : index
    %7 = vector.load %arg2[%c0_2, %c0_3] : memref<128x128xf32, #tpu.memory_space<vmem>>, vector<128x128xf32>
    %cst = arith.constant dense<0.000000e+00> : vector<72x128xf32>
    %8 = tpu.matmul %6, %7, %cst {dimension_numbers = #tpu.dot_dimension_numbers<[1], [0], [0], [1], [0, 0, 1, 1], [], []>} : vector<72x128xf32>, vector<128x128xf32>, vector<72x128xf32> -> vector<72x128xf32>
    %c0_4 = arith.constant 0 : index
    %c0_5 = arith.constant 0 : index
    %9 = vector.load %arg3[%c0_4, %c0_5] : memref<1x128xf32, #tpu.memory_space<vmem>>, vector<1x128xf32>
    %10 = vector.broadcast %9 : vector<1x128xf32> to vector<72x128xf32>
    %11 = arith.addf %8, %10 : vector<72x128xf32>
    %cst_6 = arith.constant 0.000000e+00 : f32
    %12 = vector.broadcast %cst_6 : f32 to vector<72x128xf32>
    %13 = arith.maximumf %11, %12 : vector<72x128xf32>
    %14 = vector.extract_strided_slice %13 {offsets = [0, 0], sizes = [8, 128], strides = [1, 1]} : vector<72x128xf32> to vector<8x128xf32>
    %15 = vector.extract_strided_slice %13 {offsets = [8, 0], sizes = [8, 128], strides = [1, 1]} : vector<72x128xf32> to vector<8x128xf32>
    %16 = vector.extract_strided_slice %13 {offsets = [16, 0], sizes = [8, 128], strides = [1, 1]} : vector<72x128xf32> to vector<8x128xf32>
    %17 = vector.extract_strided_slice %13 {offsets = [24, 0], sizes = [8, 128], strides = [1, 1]} : vector<72x128xf32> to vector<8x128xf32>
    %18 = vector.extract_strided_slice %13 {offsets = [32, 0], sizes = [8, 128], strides = [1, 1]} : vector<72x128xf32> to vector<8x128xf32>
    %19 = vector.extract_strided_slice %13 {offsets = [40, 0], sizes = [8, 128], strides = [1, 1]} : vector<72x128xf32> to vector<8x128xf32>
    %20 = vector.extract_strided_slice %13 {offsets = [48, 0], sizes = [8, 128], strides = [1, 1]} : vector<72x128xf32> to vector<8x128xf32>
    %21 = vector.extract_strided_slice %13 {offsets = [56, 0], sizes = [8, 128], strides = [1, 1]} : vector<72x128xf32> to vector<8x128xf32>
    %22 = vector.extract_strided_slice %13 {offsets = [64, 0], sizes = [8, 128], strides = [1, 1]} : vector<72x128xf32> to vector<8x128xf32>
    %c0_7 = arith.constant 0 : index
    %c0_8 = arith.constant 0 : index
    %23 = vector.load %arg4[%c0_7, %c0_8] : memref<1x128xf32, #tpu.memory_space<vmem>>, vector<1x128xf32>
    %24 = vector.broadcast %23 : vector<1x128xf32> to vector<8x128xf32>
    %25 = arith.mulf %22, %24 : vector<8x128xf32>
    %26 = arith.maximumf %14, %15 : vector<8x128xf32>
    %27 = arith.maximumf %16, %17 : vector<8x128xf32>
    %28 = arith.maximumf %18, %19 : vector<8x128xf32>
    %29 = arith.maximumf %20, %21 : vector<8x128xf32>
    %30 = arith.maximumf %26, %27 : vector<8x128xf32>
    %31 = arith.maximumf %28, %29 : vector<8x128xf32>
    %32 = arith.maximumf %30, %31 : vector<8x128xf32>
    %33 = arith.maximumf %32, %25 : vector<8x128xf32>
    %c0_9 = arith.constant 0 : index
    %c0_10 = arith.constant 0 : index
    %34 = vector.load %arg5[%c0_9, %c0_10] : memref<128x128xf32, #tpu.memory_space<vmem>>, vector<128x128xf32>
    %cst_11 = arith.constant dense<0.000000e+00> : vector<8x128xf32>
    %35 = tpu.matmul %33, %34, %cst_11 {dimension_numbers = #tpu.dot_dimension_numbers<[1], [0], [0], [1], [0, 0, 1, 1], [], []>} : vector<8x128xf32>, vector<128x128xf32>, vector<8x128xf32> -> vector<8x128xf32>
    %c0_12 = arith.constant 0 : index
    %c0_13 = arith.constant 0 : index
    %36 = vector.load %arg6[%c0_12, %c0_13] : memref<1x128xf32, #tpu.memory_space<vmem>>, vector<1x128xf32>
    %37 = vector.broadcast %36 : vector<1x128xf32> to vector<8x128xf32>
    %38 = arith.addf %35, %37 : vector<8x128xf32>
    %c0_14 = arith.constant 0 : index
    %c0_15 = arith.constant 0 : index
    %39 = vector.load %arg7[%c0_14, %c0_15] : memref<8x128xf32, #tpu.memory_space<vmem>>, vector<8x128xf32>
    tpu.vector_store %arg7[%c0_14, %c0_15], %38 {strides = array<i32>} : memref<8x128xf32, #tpu.memory_space<vmem>>, vector<8x128xf32>,
    return
  }
  func.func @transform_0(%arg0: i32) -> (i32, i32, i32) {
    %c0_i32 = arith.constant 0 : i32
    %c0_i32_0 = arith.constant 0 : i32
    %c0_i32_1 = arith.constant 0 : i32
    return %c0_i32, %arg0, %c0_i32_0 : i32, i32, i32
  }
  func.func @transform_1(%arg0: i32) -> (i32, i32) {
    %c0_i32 = arith.constant 0 : i32
    %c0_i32_0 = arith.constant 0 : i32
    %c0_i32_1 = arith.constant 0 : i32
    return %c0_i32, %c0_i32_0 : i32, i32
  }
  func.func @transform_2(%arg0: i32) -> (i32, i32) {
    %c0_i32 = arith.constant 0 : i32
    %c0_i32_0 = arith.constant 0 : i32
    %c0_i32_1 = arith.constant 0 : i32
    return %c0_i32, %c0_i32_0 : i32, i32
  }
  func.func @transform_3(%arg0: i32) -> (i32, i32) {
    %c0_i32 = arith.constant 0 : i32
    %c0_i32_0 = arith.constant 0 : i32
    %c0_i32_1 = arith.constant 0 : i32
    return %c0_i32, %c0_i32_0 : i32, i32
  }
  func.func @transform_4(%arg0: i32) -> (i32, i32) {
    %c0_i32 = arith.constant 0 : i32
    %c0_i32_0 = arith.constant 0 : i32
    %c0_i32_1 = arith.constant 0 : i32
    return %c0_i32, %c0_i32_0 : i32, i32
  }
  func.func @transform_5(%arg0: i32) -> (i32, i32) {
    %c0_i32 = arith.constant 0 : i32
    %c0_i32_0 = arith.constant 0 : i32
    %c0_i32_1 = arith.constant 0 : i32
    return %c0_i32, %c0_i32_0 : i32, i32
  }
  func.func @transform_6(%arg0: i32) -> (i32, i32) {
    %c0_i32 = arith.constant 0 : i32
    %c0_i32_0 = arith.constant 0 : i32
    return %arg0, %c0_i32 : i32, i32
  }
}

</mosaic_0001>

<llo_original>
// kernel: _forward.1
$region0: #{_forward.1}
  #allocation0 [shape = 'u32[]', space=smem, size = 0x4, offset = 0x4, fixed_abs, tag = 'smem constant byte address 0x4 - core index']
  #allocation1 [shape = 'u32[144,128]{1,0:T(1,128)}', space=vmem, size = 0x12000, scoped, tag = 'internal scratch']
  %s0 = inlined_call_operand.vmem [shape: f32[12,8,32], index: 0, kind: input, shape index: {}]
  %s1 = inlined_call_operand.vmem [shape: f32[128,128], index: 1, kind: input, shape index: {}]
  %s2 = inlined_call_operand.vmem [shape: f32[1,128], index: 2, kind: input, shape index: {}]
  %s3 = inlined_call_operand.vmem [shape: f32[1,128], index: 3, kind: input, shape index: {}]
  %s4 = inlined_call_operand.vmem [shape: f32[128,128], index: 4, kind: input, shape index: {}]
  %s5 = inlined_call_operand.vmem [shape: f32[1,128], index: 5, kind: input, shape index: {}]
  %s6 = inlined_call_operand.vmem [shape: f32[8,128], index: 6, kind: output, shape index: {}]
  %s7 = sld [smem:[#allocation0]]
  $region34: #{_forward.1} parent=0
    _
  %s9 = ssub.s32 1, %s7
  %s10 = scalar_select 0, %s9, %s7
  // Predicated region
  $region2: #{_forward.1} parent=0 // pred_check
    _
  $region3: #{_forward.1} parent=0 // pred_check_branch
    %12 = sbr.rel (0) target = $region5
  $region4: #{_forward.1} parent=0 // pred_region
    _
  $region5: #{_forward.1} parent=0 // pred_fallthru
    _
  // Predicated region
  $region6: #{_forward.1} parent=0 // pred_check
    _
  $region7: #{_forward.1} parent=0 // pred_check_branch
    %14 = sbr.rel (0) target = $region9
  $region8: #{_forward.1} parent=0 // pred_region
    _
  $region9: #{_forward.1} parent=0 // pred_fallthru
    _
  // Predicated region
  $region10: #{_forward.1} parent=0 // pred_check
    _
  $region11: #{_forward.1} parent=0 // pred_check_branch
    %16 = sbr.rel (0) target = $region13
  $region12: #{_forward.1} parent=0 // pred_region
    _
  $region13: #{_forward.1} parent=0 // pred_fallthru
    _
  // Predicated region
  $region14: #{_forward.1} parent=0 // pred_check
    _
  $region15: #{_forward.1} parent=0 // pred_check_branch
    %18 = sbr.rel (0) target = $region17
  $region16: #{_forward.1} parent=0 // pred_region
    _
  $region17: #{_forward.1} parent=0 // pred_fallthru
    _
  // Predicated region
  $region18: #{_forward.1} parent=0 // pred_check
    _
  $region19: #{_forward.1} parent=0 // pred_check_branch
    %20 = sbr.rel (0) target = $region21
  $region20: #{_forward.1} parent=0 // pred_region
    _
  $region21: #{_forward.1} parent=0 // pred_fallthru
    _
  // Predicated region
  $region22: #{_forward.1} parent=0 // pred_check
    _
  $region23: #{_forward.1} parent=0 // pred_check_branch
    %22 = sbr.rel (0) target = $region25
  $region24: #{_forward.1} parent=0 // pred_region
    _
  $region25: #{_forward.1} parent=0 // pred_fallthru
    _
  %v23 = vld [vmem:[%s0] sm:$0xff]
  %v24 = vld [vmem:[%s0 + $0x8] sm:$0xff]
  %v25 = vld [vmem:[%s0 + $0x10] sm:$0xff]
  %v26 = vld [vmem:[%s0 + $0x18] sm:$0xff]
  %v27 = vld [vmem:[%s0 + $0x20] sm:$0xff]
  %v28 = vld [vmem:[%s0 + $0x28] sm:$0xff]
  %v29 = vld [vmem:[%s0 + $0x30] sm:$0xff]
  %v30 = vld [vmem:[%s0 + $0x38] sm:$0xff]
  %v31 = vld [vmem:[%s0 + $0x40] sm:$0xff]
  %v32 = vld [vmem:[%s0 + $0x48] sm:$0xff]
  %v33 = vld [vmem:[%s0 + $0x50] sm:$0xff]
  %v34 = vld [vmem:[%s0 + $0x58] sm:$0xff]
  %44 = vrot.lane.b32.xlu0 %v24, 32
  %v45 = vpop.permute.xlu0 %44
  %46 = vrot.lane.b32.xlu0 %v25, 32
  %v47 = vpop.permute.xlu0 %46
  %48 = vrot.lane.b32.xlu0 %v26, 32
  %v49 = vpop.permute.xlu0 %48
  %50 = vrot.lane.b32.xlu0 %v27, 32
  %v51 = vpop.permute.xlu0 %50
  %52 = vrot.lane.b32.xlu0 %v28, 32
  %v53 = vpop.permute.xlu0 %52
  %54 = vrot.lane.b32.xlu0 %v29, 32
  %v55 = vpop.permute.xlu0 %54
  %56 = vrot.lane.b32.xlu0 %v30, 32
  %v57 = vpop.permute.xlu0 %56
  %58 = vrot.lane.b32.xlu0 %v31, 32
  %v59 = vpop.permute.xlu0 %58
  %60 = vrot.lane.b32.xlu0 %v32, 32
  %v61 = vpop.permute.xlu0 %60
  %72 = vrot.lane.b32.xlu0 %v25, 64
  %v73 = vpop.permute.xlu0 %72
  %74 = vrot.lane.b32.xlu0 %v26, 64
  %v75 = vpop.permute.xlu0 %74
  %76 = vrot.lane.b32.xlu0 %v27, 64
  %v77 = vpop.permute.xlu0 %76
  %78 = vrot.lane.b32.xlu0 %v28, 64
  %v79 = vpop.permute.xlu0 %78
  %80 = vrot.lane.b32.xlu0 %v29, 64
  %v81 = vpop.permute.xlu0 %80
  %82 = vrot.lane.b32.xlu0 %v30, 64
  %v83 = vpop.permute.xlu0 %82
  %84 = vrot.lane.b32.xlu0 %v31, 64
  %v85 = vpop.permute.xlu0 %84
  %86 = vrot.lane.b32.xlu0 %v32, 64
  %v87 = vpop.permute.xlu0 %86
  %88 = vrot.lane.b32.xlu0 %v33, 64
  %v89 = vpop.permute.xlu0 %88
  %100 = vrot.lane.b32.xlu0 %v26, 96
  %v101 = vpop.permute.xlu0 %100
  %102 = vrot.lane.b32.xlu0 %v27, 96
  %v103 = vpop.permute.xlu0 %102
  %104 = vrot.lane.b32.xlu0 %v28, 96
  %v105 = vpop.permute.xlu0 %104
  %106 = vrot.lane.b32.xlu0 %v29, 96
  %v107 = vpop.permute.xlu0 %106
  %108 = vrot.lane.b32.xlu0 %v30, 96
  %v109 = vpop.permute.xlu0 %108
  %110 = vrot.lane.b32.xlu0 %v31, 96
  %v111 = vpop.permute.xlu0 %110
  %112 = vrot.lane.b32.xlu0 %v32, 96
  %v113 = vpop.permute.xlu0 %112
  %114 = vrot.lane.b32.xlu0 %v33, 96
  %v115 = vpop.permute.xlu0 %114
  %116 = vrot.lane.b32.xlu0 %v34, 96
  %v117 = vpop.permute.xlu0 %116
  %vm127 = vcmask 261120
  %v128 = vsel %vm127, %v23, %v45
  %v129 = vsel %vm127, %v24, %v47
  %v130 = vsel %vm127, %v25, %v49
  %v131 = vsel %vm127, %v26, %v51
  %v132 = vsel %vm127, %v27, %v53
  %v133 = vsel %vm127, %v28, %v55
  %v134 = vsel %vm127, %v29, %v57
  %v135 = vsel %vm127, %v30, %v59
  %v136 = vsel %vm127, %v31, %v61
  %vm137 = vcmask 523264
  %v138 = vsel %vm137, %v128, %v73
  %v139 = vsel %vm137, %v129, %v75
  %v140 = vsel %vm137, %v130, %v77
  %v141 = vsel %vm137, %v131, %v79
  %v142 = vsel %vm137, %v132, %v81
  %v143 = vsel %vm137, %v133, %v83
  %v144 = vsel %vm137, %v134, %v85
  %v145 = vsel %vm137, %v135, %v87
  %v146 = vsel %vm137, %v136, %v89
  %vm147 = vcmask 785408
  %v148 = vsel %vm147, %v138, %v101
  %v149 = vsel %vm147, %v139, %v103
  %v150 = vsel %vm147, %v140, %v105
  %v151 = vsel %vm147, %v141, %v107
  %v152 = vsel %vm147, %v142, %v109
  %v153 = vsel %vm147, %v143, %v111
  %v154 = vsel %vm147, %v144, %v113
  %v155 = vsel %vm147, %v145, %v115
  %v156 = vsel %vm147, %v146, %v117
  %v157 = vld [vmem:[%s1] sm:$0xff]
  %v158 = vld [vmem:[%s1 + $0x8] sm:$0xff]
  %v159 = vld [vmem:[%s1 + $0x10] sm:$0xff]
  %v160 = vld [vmem:[%s1 + $0x18] sm:$0xff]
  %v161 = vld [vmem:[%s1 + $0x20] sm:$0xff]
  %v162 = vld [vmem:[%s1 + $0x28] sm:$0xff]
  %v163 = vld [vmem:[%s1 + $0x30] sm:$0xff]
  %v164 = vld [vmem:[%s1 + $0x38] sm:$0xff]
  %v165 = vld [vmem:[%s1 + $0x40] sm:$0xff]
  %v166 = vld [vmem:[%s1 + $0x48] sm:$0xff]
  %v167 = vld [vmem:[%s1 + $0x50] sm:$0xff]
  %v168 = vld [vmem:[%s1 + $0x58] sm:$0xff]
  %v169 = vld [vmem:[%s1 + $0x60] sm:$0xff]
  %v170 = vld [vmem:[%s1 + $0x68] sm:$0xff]
  %v171 = vld [vmem:[%s1 + $0x70] sm:$0xff]
  %v172 = vld [vmem:[%s1 + $0x78] sm:$0xff]
  %v173 = vld [vmem:[%s2] sm:$0x1]
  %v175 = vlaneseq
  %v176 = vshrl.u32 %v175, 7
  %v177 = vsub.s32 0, %v176
  %v178 = vrot.slane %v173, %v177
  %180 = vmatprep.subr.mxu0 0.0
  %181 = vmatpush1.msra.mxu0 %v157
  %182 = vmatprep.subr.mxu0 0.0
  %183 = vmatpush1.msra.mxu0 %v158
  %184 = vmatprep.subr.mxu0 0.0
  %185 = vmatpush1.msra.mxu0 %v159
  %186 = vmatprep.subr.mxu0 0.0
  %187 = vmatpush1.msra.mxu0 %v160
  %188 = vmatprep.subr.mxu0 0.0
  %189 = vmatpush1.msra.mxu0 %v161
  %190 = vmatprep.subr.mxu0 0.0
  %191 = vmatpush1.msra.mxu0 %v162
  %192 = vmatprep.subr.mxu0 0.0
  %193 = vmatpush1.msra.mxu0 %v163
  %194 = vmatprep.subr.mxu0 0.0
  %195 = vmatpush1.msra.mxu0 %v164
  %196 = vmatprep.subr.mxu0 0.0
  %197 = vmatpush1.msra.mxu0 %v165
  %198 = vmatprep.subr.mxu0 0.0
  %199 = vmatpush1.msra.mxu0 %v166
  %200 = vmatprep.subr.mxu0 0.0
  %201 = vmatpush1.msra.mxu0 %v167
  %202 = vmatprep.subr.mxu0 0.0
  %203 = vmatpush1.msra.mxu0 %v168
  %204 = vmatprep.subr.mxu0 0.0
  %205 = vmatpush1.msra.mxu0 %v169
  %206 = vmatprep.subr.mxu0 0.0
  %207 = vmatpush1.msra.mxu0 %v170
  %208 = vmatprep.subr.mxu0 0.0
  %209 = vmatpush1.msra.mxu0 %v171
  %210 = vmatprep.subr.mxu0 0.0
  %211 = vmatpush1.msra.mxu0 %v172
  %212 = vmatprep.subr.mxu0 0.0
  %213 = vmatpush1.msra.mxu0 0.0
  %214 = vmatprep.subr.mxu0 0.0
  %215 = vmatpush1.msra.mxu0 0.0
  %216 = vmatprep.subr.mxu0 0.0
  %217 = vmatpush1.msra.mxu0 0.0
  %218 = vmatprep.subr.mxu0 0.0
  %219 = vmatpush1.msra.mxu0 0.0
  %220 = vmatprep.subr.mxu0 0.0
  %221 = vmatpush1.msra.mxu0 0.0
  %222 = vmatprep.subr.mxu0 0.0
  %223 = vmatpush1.msra.mxu0 0.0
  %224 = vmatprep.subr.mxu0 0.0
  %225 = vmatpush1.msra.mxu0 0.0
  %226 = vmatprep.subr.mxu0 0.0
  %227 = vmatpush1.msra.mxu0 0.0
  %228 = vmatprep.subr.mxu0 0.0
  %229 = vmatpush1.msra.mxu0 0.0
  %230 = vmatprep.subr.mxu0 0.0
  %231 = vmatpush1.msra.mxu0 0.0
  %232 = vmatprep.subr.mxu0 0.0
  %233 = vmatpush1.msra.mxu0 0.0
  %234 = vmatprep.subr.mxu0 0.0
  %235 = vmatpush1.msra.mxu0 0.0
  %236 = vmatprep.subr.mxu0 0.0
  %237 = vmatpush1.msra.mxu0 0.0
  %238 = vmatprep.subr.mxu0 0.0
  %239 = vmatpush1.msra.mxu0 0.0
  %240 = vmatprep.subr.mxu0 0.0
  %241 = vmatpush1.msra.mxu0 0.0
  %242 = vmatprep.subr.mxu0 0.0
  %243 = vmatpush1.msra.mxu0 0.0
  %244 = vmatprep.mubr.f32.mxu0 0.0
  %245 = vmatmul.mubr.f32.gmra.mrb[0].mxu0 %v148
  %v246 = vpop.f32.mrb[0].mxu0
  %v247 = vadd.f32 %v178, %v246
  %v248 = vpop.f32.mrb[0].mxu0
  %249 = vmatprep.mubr.f32.mxu0 0.0
  %250 = vmatmul.mubr.f32.gmra.mrb[0].mxu0 %v149
  %v251 = vpop.f32.mrb[0].mxu0
  %v252 = vadd.f32 %v178, %v251
  %v253 = vpop.f32.mrb[0].mxu0
  %254 = vmatprep.mubr.f32.mxu0 0.0
  %255 = vmatmul.mubr.f32.gmra.mrb[0].mxu0 %v150
  %v256 = vpop.f32.mrb[0].mxu0
  %v257 = vadd.f32 %v178, %v256
  %v258 = vpop.f32.mrb[0].mxu0
  %259 = vmatprep.mubr.f32.mxu0 0.0
  %260 = vmatmul.mubr.f32.gmra.mrb[0].mxu0 %v151
  %v261 = vpop.f32.mrb[0].mxu0
  %v262 = vadd.f32 %v178, %v261
  %v263 = vpop.f32.mrb[0].mxu0
  %264 = vmatprep.mubr.f32.mxu0 0.0
  %265 = vmatmul.mubr.f32.gmra.mrb[0].mxu0 %v152
  %v266 = vpop.f32.mrb[0].mxu0
  %v267 = vadd.f32 %v178, %v266
  %v268 = vpop.f32.mrb[0].mxu0
  %269 = vmatprep.mubr.f32.mxu0 0.0
  %270 = vmatmul.mubr.f32.gmra.mrb[0].mxu0 %v153
  %v271 = vpop.f32.mrb[0].mxu0
  %v272 = vadd.f32 %v178, %v271
  %v273 = vpop.f32.mrb[0].mxu0
  %274 = vmatprep.mubr.f32.mxu0 0.0
  %275 = vmatmul.mubr.f32.gmra.mrb[0].mxu0 %v154
  %v276 = vpop.f32.mrb[0].mxu0
  %v277 = vadd.f32 %v178, %v276
  %v278 = vpop.f32.mrb[0].mxu0
  %279 = vmatprep.mubr.f32.mxu0 0.0
  %280 = vmatmul.mubr.f32.gmra.mrb[0].mxu0 %v155
  %v281 = vpop.f32.mrb[0].mxu0
  %v282 = vadd.f32 %v178, %v281
  %v283 = vpop.f32.mrb[0].mxu0
  %284 = vmatprep.mubr.f32.mxu0 0.0
  %285 = vmatmul.mubr.f32.gmra.mrb[0].mxu0 %v156
  %v286 = vpop.f32.mrb[0].mxu0
  %v287 = vadd.f32 %v178, %v286
  %v288 = vpop.f32.mrb[0].mxu0
  %289 = vdwg.mxu0
  %v290 = vmax.f32 %v247, 0.0
  %v291 = vmax.f32 %v252, 0.0
  %v292 = vmax.f32 %v257, 0.0
  %v293 = vmax.f32 %v262, 0.0
  %v294 = vmax.f32 %v267, 0.0
  %v295 = vmax.f32 %v272, 0.0
  %v296 = vmax.f32 %v277, 0.0
  %v297 = vmax.f32 %v282, 0.0
  %v298 = vmax.f32 %v287, 0.0
  %v299 = vld [vmem:[%s3] sm:$0x1]
  %v301 = vlaneseq
  %v302 = vshrl.u32 %v301, 7
  %v303 = vsub.s32 0, %v302
  %v304 = vrot.slane %v299, %v303
  %v306 = vmul.f32 %v298, %v304
  %v307 = vmax.f32 %v290, %v291
  %v308 = vmax.f32 %v292, %v293
  %v309 = vmax.f32 %v294, %v295
  %v310 = vmax.f32 %v296, %v297
  %v311 = vmax.f32 %v307, %v308
  %v312 = vmax.f32 %v309, %v310
  %v313 = vmax.f32 %v311, %v312
  %v314 = vmax.f32 %v313, %v306
  %v315 = vld [vmem:[%s4] sm:$0xff]
  %v316 = vld [vmem:[%s4 + $0x8] sm:$0xff]
  %v317 = vld [vmem:[%s4 + $0x10] sm:$0xff]
  %v318 = vld [vmem:[%s4 + $0x18] sm:$0xff]
  %v319 = vld [vmem:[%s4 + $0x20] sm:$0xff]
  %v320 = vld [vmem:[%s4 + $0x28] sm:$0xff]
  %v321 = vld [vmem:[%s4 + $0x30] sm:$0xff]
  %v322 = vld [vmem:[%s4 + $0x38] sm:$0xff]
  %v323 = vld [vmem:[%s4 + $0x40] sm:$0xff]
  %v324 = vld [vmem:[%s4 + $0x48] sm:$0xff]
  %v325 = vld [vmem:[%s4 + $0x50] sm:$0xff]
  %v326 = vld [vmem:[%s4 + $0x58] sm:$0xff]
  %v327 = vld [vmem:[%s4 + $0x60] sm:$0xff]
  %v328 = vld [vmem:[%s4 + $0x68] sm:$0xff]
  %v329 = vld [vmem:[%s4 + $0x70] sm:$0xff]
  %v330 = vld [vmem:[%s4 + $0x78] sm:$0xff]
  %v331 = vld [vmem:[%s5] sm:$0x1]
  %v333 = vlaneseq
  %v334 = vshrl.u32 %v333, 7
  %v335 = vsub.s32 0, %v334
  %v336 = vrot.slane %v331, %v335
  %338 = vmatprep.subr.mxu0 0.0
  %339 = vmatpush1.msra.mxu0 %v315
  %340 = vmatprep.subr.mxu0 0.0
  %341 = vmatpush1.msra.mxu0 %v316
  %342 = vmatprep.subr.mxu0 0.0
  %343 = vmatpush1.msra.mxu0 %v317
  %344 = vmatprep.subr.mxu0 0.0
  %345 = vmatpush1.msra.mxu0 %v318
  %346 = vmatprep.subr.mxu0 0.0
  %347 = vmatpush1.msra.mxu0 %v319
  %348 = vmatprep.subr.mxu0 0.0
  %349 = vmatpush1.msra.mxu0 %v320
  %350 = vmatprep.subr.mxu0 0.0
  %351 = vmatpush1.msra.mxu0 %v321
  %352 = vmatprep.subr.mxu0 0.0
  %353 = vmatpush1.msra.mxu0 %v322
  %354 = vmatprep.subr.mxu0 0.0
  %355 = vmatpush1.msra.mxu0 %v323
  %356 = vmatprep.subr.mxu0 0.0
  %357 = vmatpush1.msra.mxu0 %v324
  %358 = vmatprep.subr.mxu0 0.0
  %359 = vmatpush1.msra.mxu0 %v325
  %360 = vmatprep.subr.mxu0 0.0
  %361 = vmatpush1.msra.mxu0 %v326
  %362 = vmatprep.subr.mxu0 0.0
  %363 = vmatpush1.msra.mxu0 %v327
  %364 = vmatprep.subr.mxu0 0.0
  %365 = vmatpush1.msra.mxu0 %v328
  %366 = vmatprep.subr.mxu0 0.0
  %367 = vmatpush1.msra.mxu0 %v329
  %368 = vmatprep.subr.mxu0 0.0
  %369 = vmatpush1.msra.mxu0 %v330
  %370 = vmatprep.subr.mxu0 0.0
  %371 = vmatpush1.msra.mxu0 0.0
  %372 = vmatprep.subr.mxu0 0.0
  %373 = vmatpush1.msra.mxu0 0.0
  %374 = vmatprep.subr.mxu0 0.0
  %375 = vmatpush1.msra.mxu0 0.0
  %376 = vmatprep.subr.mxu0 0.0
  %377 = vmatpush1.msra.mxu0 0.0
  %378 = vmatprep.subr.mxu0 0.0
  %379 = vmatpush1.msra.mxu0 0.0
  %380 = vmatprep.subr.mxu0 0.0
  %381 = vmatpush1.msra.mxu0 0.0
  %382 = vmatprep.subr.mxu0 0.0
  %383 = vmatpush1.msra.mxu0 0.0
  %384 = vmatprep.subr.mxu0 0.0
  %385 = vmatpush1.msra.mxu0 0.0
  %386 = vmatprep.subr.mxu0 0.0
  %387 = vmatpush1.msra.mxu0 0.0
  %388 = vmatprep.subr.mxu0 0.0
  %389 = vmatpush1.msra.mxu0 0.0
  %390 = vmatprep.subr.mxu0 0.0
  %391 = vmatpush1.msra.mxu0 0.0
  %392 = vmatprep.subr.mxu0 0.0
  %393 = vmatpush1.msra.mxu0 0.0
  %394 = vmatprep.subr.mxu0 0.0
  %395 = vmatpush1.msra.mxu0 0.0
  %396 = vmatprep.subr.mxu0 0.0
  %397 = vmatpush1.msra.mxu0 0.0
  %398 = vmatprep.subr.mxu0 0.0
  %399 = vmatpush1.msra.mxu0 0.0
  %400 = vmatprep.subr.mxu0 0.0
  %401 = vmatpush1.msra.mxu0 0.0
  %402 = vmatprep.mubr.f32.mxu0 0.0
  %403 = vmatmul.mubr.f32.gmra.mrb[0].mxu0 %v314
  %v404 = vpop.f32.mrb[0].mxu0
  %v405 = vadd.f32 %v336, %v404
  %v406 = vpop.f32.mrb[0].mxu0
  %407 = vdwg.mxu0
  %408 = vst [vmem:[%s6] sm:$0xff] %v405
  // Predicated region
  $region26: #{_forward.1} parent=0 // pred_check
    _
  $region27: #{_forward.1} parent=0 // pred_check_branch
    %410 = sbr.rel (0) target = $region29
  $region28: #{_forward.1} parent=0 // pred_region
    _
  $region29: #{_forward.1} parent=0 // pred_fallthru
    _
  // Predicated region
  $region30: #{_forward.1} parent=0 // pred_check
    _
  $region31: #{_forward.1} parent=0 // pred_check_branch
    %412 = sbr.rel (0) target = $region33
  $region32: #{_forward.1} parent=0 // pred_region
    _
  $region33: #{_forward.1} parent=0 // pred_fallthru
    _

</llo_original>
